<compile_context>
chip_gen: v5e
topology: v5e:2x2
jax: 0.10.0
libtpu: 0.0.40
codegen_flags: <defaults>
</compile_context>

<pallas_src>
import functools

import numpy as np
import jax
import jax.numpy as jnp
from jax import lax
from jax.experimental import pallas as pl
from jax.experimental.pallas import tpu as pltpu

KERNEL = 3
PAD = KERNEL // 2


def _chunk_reduce(x_ref):
    """Single pass over this block's channels: running f32 sum + running max."""
    _, bc, _ = x_ref.shape
    first = x_ref[:, 0, :]
    s = first.astype(jnp.float32)
    m = first
    for c in range(1, bc):
        p = x_ref[:, c, :]
        s = s + p.astype(jnp.float32)
        m = jnp.maximum(m, p)
    return s, m.astype(jnp.float32)


def _conv_sigmoid_store(s, m, w_ref, o_ref, width):
    """3x3 zero-padded conv over the two (bn, hw) maps + sigmoid, lane-dense store.

    s: channel SUM (avg weights are pre-divided by C), m: channel MAX.
    """
    bn, hw = s.shape
    w_lane = width

    # Flat spatial index bookkeeping; edge masks hoisted and reused.
    flat = lax.broadcasted_iota(jnp.int32, (bn, hw), 1)
    col = flat % w_lane
    left_col = col < 1                    # dx = -1 zero region (first column)
    right_col = col >= w_lane - 1         # dx = +1 zero region (last column)
    top_rows = flat < w_lane              # dy = -1 zero region (first image row)
    bot_rows = flat >= hw - w_lane        # dy = +1 zero region (last image row)

    def hshift(a, dx):
        """a'[k] = a[k + dx] within the same image row; 0 past the row edge."""
        if dx == 0:
            return a
        r = pltpu.roll(a, shift=(-dx) % hw, axis=1)
        return jnp.where(right_col if dx > 0 else left_col, 0.0, r)

    # 3 lane-shifted variants per map, reused across the 3 kernel rows.
    s_h = [hshift(s, dx) for dx in (-1, 0, 1)]
    m_h = [hshift(m, dx) for dx in (-1, 0, 1)]

    acc = jnp.zeros((bn, hw), jnp.float32)
    for kh in range(KERNEL):
        dy = kh - PAD
        # Horizontally-convolved row contribution (both maps fused).
        row_acc = jnp.zeros((bn, hw), jnp.float32)
        for kw in range(KERNEL):
            w_avg = w_ref[0 * KERNEL * KERNEL + kh * KERNEL + kw]
            w_max = w_ref[1 * KERNEL * KERNEL + kh * KERNEL + kw]
            row_acc = row_acc + w_avg * s_h[kw] + w_max * m_h[kw]
        if dy == 0:
            acc = acc + row_acc
        else:
            # Vertical shift by dy rows == lane roll by dy*W, zero-filled rows.
            r = pltpu.roll(row_acc, shift=(-dy * w_lane) % hw, axis=1)
            acc = acc + jnp.where(bot_rows if dy > 0 else top_rows, 0.0, r)

    # Lane-dense (H*W-wide) store; sigmoid's exp goes to the EUP (free slot).
    o_ref[:, 0, :] = jax.nn.sigmoid(acc).astype(o_ref.dtype)


def _sa_kernel_single(x_ref, w_ref, o_ref, sum_ref, max_ref, *, width):
    # All channels fit in one block: no scratch round-trip needed.
    del sum_ref, max_ref
    s, m = _chunk_reduce(x_ref)
    _conv_sigmoid_store(s, m, w_ref, o_ref, width)


def _sa_kernel_chunked(x_ref, w_ref, o_ref, sum_ref, max_ref, *, width):
    # Channels split across the trailing "arbitrary" grid axis; running
    # sum/max live in VMEM scratch (persist across the C steps of one batch
    # chunk).  Output block index is constant across C -> single writeback.
    c = pl.program_id(1)
    s, m = _chunk_reduce(x_ref)

    @pl.when(c == 0)
    def _():
        sum_ref[...] = s
        max_ref[...] = m

    @pl.when(c != 0)
    def _():
        sum_ref[...] = sum_ref[...] + s
        max_ref[...] = jnp.maximum(max_ref[...], m)

    @pl.when(c == pl.num_programs(1) - 1)
    def _():
        _conv_sigmoid_store(sum_ref[...], max_ref[...], w_ref, o_ref, width)


def spatial_attention(x, w, *, block_n=None, block_c=None,
                      vmem_block_budget=6 * 1024 * 1024):
    """x: (N, C, H, W); w: (1, 2, 3, 3) conv weight (PyTorch OIHW). -> (N, 1, H, W)."""
    N, C, H, W = x.shape
    HW = H * W
    itemsize = jnp.dtype(x.dtype).itemsize

    # Free (metadata-only) reshape to the lane-dense flattened-spatial layout.
    x_flat = x.reshape(N, C, HW)

    # Fold 1/C into the avg-path weights (conv is linear) -> kernel only needs
    # the channel SUM; pack both 3x3 filters into one SMEM scalar vector.
    w = w.astype(jnp.float32)
    w_flat = jnp.concatenate([(w[0, 0] / C).reshape(-1), w[0, 1].reshape(-1)])

    # ---- tiling: keep one input block ~vmem_block_budget bytes --------------
    per_batch_bytes = C * HW * itemsize
    if block_c is None:
        if per_batch_bytes <= vmem_block_budget:
            block_c = C                      # no channel chunking needed
        else:
            # Largest divisor of C that is a multiple of 8 (sublane rule) and
            # keeps a (1, block_c, HW) block within the budget.
            block_c = C
            cap = max(8, vmem_block_budget // max(1, HW * itemsize))
            start = 8 * (min(C, cap) // 8)
            for cand in range(start, 0, -8):
                if C % cand == 0:
                    block_c = cand
                    break
            # TODO(synk): if C has no multiple-of-8 divisor the full-C block is
            # kept; such (rare, huge) shapes would need a masked partial-chunk
            # path or a larger vmem_limit_bytes.

    if block_n is None:
        block_bytes = max(1, block_c * HW * itemsize)
        block_n = max(1, min(N, vmem_block_budget // block_bytes))
        if N >= 2:
            # keep >= 2 steps on the parallel axis so both v7x TCs get work
            block_n = min(block_n, pl.cdiv(N, 2))

    n_steps = pl.cdiv(N, block_n)
    c_steps = pl.cdiv(C, block_c)

    kernel_fn = _sa_kernel_single if c_steps == 1 else _sa_kernel_chunked
    kernel = functools.partial(kernel_fn, width=W)

    out_flat = pl.pallas_call(
        kernel,
        out_shape=jax.ShapeDtypeStruct((N, 1, HW), x.dtype),
        grid=(n_steps, c_steps),
        in_specs=[
            pl.BlockSpec((block_n, block_c, HW), lambda n, c: (n, c, 0)),
            pl.BlockSpec(memory_space=pltpu.MemorySpace.SMEM),
        ],
        out_specs=pl.BlockSpec((block_n, 1, HW), lambda n, c: (n, 0, 0)),
        scratch_shapes=[
            pltpu.VMEM((block_n, HW), jnp.float32),   # running channel sum
            pltpu.VMEM((block_n, HW), jnp.float32),   # running channel max
        ],
        compiler_params=pltpu.CompilerParams(
            dimension_semantics=("parallel", "arbitrary"),
            vmem_limit_bytes=32 * 1024 * 1024,
        ),
    )(x_flat, w_flat)

    return out_flat.reshape(N, 1, H, W)


def spatial_attention_ref(x, w):
    """Pure-JAX reference mirroring the PyTorch forward."""
    avg = jnp.mean(x, axis=1, keepdims=True)
    mx = jnp.max(x, axis=1, keepdims=True)
    cat = jnp.concatenate([avg, mx], axis=1)          # (N, 2, H, W)
    y = lax.conv_general_dilated(
        cat, w, window_strides=(1, 1), padding=((PAD, PAD), (PAD, PAD)),
        dimension_numbers=("NCHW", "OIHW", "NCHW"))
    return jax.nn.sigmoid(y)


if __name__ == "__main__":
    key = jax.random.PRNGKey(0)
    kx, kw = jax.random.split(key)

    N, C, H, W = 2, 4, 16, 16
    x = jax.random.normal(kx, (N, C, H, W), dtype=jnp.float32)

    # Deterministic conv weight, shape (out=1, in=2, 3, 3) like nn.Conv2d(2,1,3).
    fan_in = 2 * KERNEL * KERNEL
    bound = 1.0 / np.sqrt(fan_in)
    w = jax.random.uniform(kw, (1, 2, KERNEL, KERNEL),
                           minval=-bound, maxval=bound, dtype=jnp.float32)

    out = jax.block_until_ready(spatial_attention(x, w))
    ref = jax.block_until_ready(spatial_attention_ref(x, w))

    assert out.shape == (N, 1, H, W)
    np.testing.assert_allclose(np.asarray(out), np.asarray(ref),
                               rtol=1e-5, atol=1e-5)

    print("KERNEL_OK")
</pallas_src>

<mosaic_0001>
module attributes {stable_mosaic.version = 11 : i64} {
  func.func @_sa_kernel_single(%arg0: i32, %arg1: i32, %arg2: memref<1x4x256xf32, #tpu.memory_space<vmem>>, %arg3: memref<18xf32, #tpu.memory_space<smem>>, %arg4: memref<1x1x256xf32, #tpu.memory_space<vmem>>, %arg5: memref<1x256xf32, #tpu.memory_space<vmem>>, %arg6: memref<1x256xf32, #tpu.memory_space<vmem>>) attributes {dimension_semantics = [#tpu.dimension_semantics<parallel>, #tpu.dimension_semantics<arbitrary>], iteration_bounds = array<i64: 2, 1>, scalar_prefetch = 0 : i64, scratch_operands = 2 : i64, tpu.core_type = #tpu.core_type<tc>, window_params = [{transform_indices = @transform_0, window_bounds = array<i64: 1, 4, 256>}, {transform_indices = @transform_1, window_bounds = array<i64: 18>}, {transform_indices = @transform_2, window_bounds = array<i64: 1, 1, 256>}]} {
    %c0 = arith.constant 0 : index
    %c0_0 = arith.constant 0 : index
    %c0_1 = arith.constant 0 : index
    %0 = vector.load %arg2[%c0, %c0_0, %c0_1] : memref<1x4x256xf32, #tpu.memory_space<vmem>>, vector<1x1x256xf32>
    %1 = vector.shape_cast %0 : vector<1x1x256xf32> to vector<1x256xf32>
    %c0_2 = arith.constant 0 : index
    %c1 = arith.constant 1 : index
    %c0_3 = arith.constant 0 : index
    %2 = vector.load %arg2[%c0_2, %c1, %c0_3] : memref<1x4x256xf32, #tpu.memory_space<vmem>>, vector<1x1x256xf32>
    %3 = vector.shape_cast %2 : vector<1x1x256xf32> to vector<1x256xf32>
    %4 = arith.addf %1, %3 : vector<1x256xf32>
    %5 = arith.maximumf %1, %3 : vector<1x256xf32>
    %c0_4 = arith.constant 0 : index
    %c2 = arith.constant 2 : index
    %c0_5 = arith.constant 0 : index
    %6 = vector.load %arg2[%c0_4, %c2, %c0_5] : memref<1x4x256xf32, #tpu.memory_space<vmem>>, vector<1x1x256xf32>
    %7 = vector.shape_cast %6 : vector<1x1x256xf32> to vector<1x256xf32>
    %8 = arith.addf %4, %7 : vector<1x256xf32>
    %9 = arith.maximumf %5, %7 : vector<1x256xf32>
    %c0_6 = arith.constant 0 : index
    %c3 = arith.constant 3 : index
    %c0_7 = arith.constant 0 : index
    %10 = vector.load %arg2[%c0_6, %c3, %c0_7] : memref<1x4x256xf32, #tpu.memory_space<vmem>>, vector<1x1x256xf32>
    %11 = vector.shape_cast %10 : vector<1x1x256xf32> to vector<1x256xf32>
    %12 = arith.addf %8, %11 : vector<1x256xf32>
    %13 = arith.maximumf %9, %11 : vector<1x256xf32>
    %14 = tpu.iota {dimensions = array<i32: 1>} : vector<1x256xi32>
    %c16_i32 = arith.constant 16 : i32
    %c0_i32 = arith.constant 0 : i32
    %15 = arith.cmpi eq, %c16_i32, %c0_i32 : i32
    %c1_i32 = arith.constant 1 : i32
    %16 = arith.select %15, %c1_i32, %c16_i32 : i32
    %17 = vector.broadcast %16 : i32 to vector<1x256xi32>
    %18 = arith.remsi %14, %17 : vector<1x256xi32>
    %c0_i32_8 = arith.constant 0 : i32
    %19 = vector.broadcast %c0_i32_8 : i32 to vector<1x256xi32>
    %20 = arith.cmpi ne, %18, %19 : vector<1x256xi32>
    %c0_i32_9 = arith.constant 0 : i32
    %21 = vector.broadcast %c0_i32_9 : i32 to vector<1x256xi32>
    %22 = arith.cmpi slt, %18, %21 : vector<1x256xi32>
    %c0_i32_10 = arith.constant 0 : i32
    %23 = arith.cmpi slt, %16, %c0_i32_10 : i32
    %24 = vector.broadcast %23 : i1 to vector<1x256xi1>
    %25 = vector.broadcast %24 : vector<1x256xi1> to vector<1x256xi1>
    %26 = arith.xori %22, %25 : vector<1x256xi1>
    %27 = arith.andi %26, %20 : vector<1x256xi1>
    %28 = vector.broadcast %16 : i32 to vector<1x256xi32>
    %29 = arith.addi %18, %28 : vector<1x256xi32>
    %30 = arith.select %27, %29, %18 : vector<1x256xi1>, vector<1x256xi32>
    %c1_i32_11 = arith.constant 1 : i32
    %31 = vector.broadcast %c1_i32_11 : i32 to vector<1x256xi32>
    %32 = arith.cmpi slt, %30, %31 : vector<1x256xi32>
    %c15_i32 = arith.constant 15 : i32
    %33 = vector.broadcast %c15_i32 : i32 to vector<1x256xi32>
    %34 = arith.cmpi sge, %30, %33 : vector<1x256xi32>
    %c16_i32_12 = arith.constant 16 : i32
    %35 = vector.broadcast %c16_i32_12 : i32 to vector<1x256xi32>
    %36 = arith.cmpi slt, %14, %35 : vector<1x256xi32>
    %c240_i32 = arith.constant 240 : i32
    %37 = vector.broadcast %c240_i32 : i32 to vector<1x256xi32>
    %38 = arith.cmpi sge, %14, %37 : vector<1x256xi32>
    %c1_i32_13 = arith.constant 1 : i32
    %39 = tpu.dynamic_rotate %12 by %c1_i32_13 dim 1 : vector<1x256xf32>, i32 -> vector<1x256xf32>
    %cst = arith.constant 0.000000e+00 : f32
    %40 = vector.broadcast %cst : f32 to vector<1x256xf32>
    %41 = arith.select %32, %40, %39 : vector<1x256xi1>, vector<1x256xf32>
    %c255_i32 = arith.constant 255 : i32
    %42 = tpu.dynamic_rotate %12 by %c255_i32 dim 1 : vector<1x256xf32>, i32 -> vector<1x256xf32>
    %cst_14 = arith.constant 0.000000e+00 : f32
    %43 = vector.broadcast %cst_14 : f32 to vector<1x256xf32>
    %44 = arith.select %34, %43, %42 : vector<1x256xi1>, vector<1x256xf32>
    %c1_i32_15 = arith.constant 1 : i32
    %45 = tpu.dynamic_rotate %13 by %c1_i32_15 dim 1 : vector<1x256xf32>, i32 -> vector<1x256xf32>
    %cst_16 = arith.constant 0.000000e+00 : f32
    %46 = vector.broadcast %cst_16 : f32 to vector<1x256xf32>
    %47 = arith.select %32, %46, %45 : vector<1x256xi1>, vector<1x256xf32>
    %c255_i32_17 = arith.constant 255 : i32
    %48 = tpu.dynamic_rotate %13 by %c255_i32_17 dim 1 : vector<1x256xf32>, i32 -> vector<1x256xf32>
    %cst_18 = arith.constant 0.000000e+00 : f32
    %49 = vector.broadcast %cst_18 : f32 to vector<1x256xf32>
    %50 = arith.select %34, %49, %48 : vector<1x256xi1>, vector<1x256xf32>
    %cst_19 = arith.constant 0.000000e+00 : f32
    %51 = vector.broadcast %cst_19 : f32 to vector<1x256xf32>
    %cst_20 = arith.constant 0.000000e+00 : f32
    %52 = vector.broadcast %cst_20 : f32 to vector<1x256xf32>
    %c0_21 = arith.constant 0 : index
    %53 = memref.load %arg3[%c0_21] : memref<18xf32, #tpu.memory_space<smem>>
    %c9 = arith.constant 9 : index
    %54 = memref.load %arg3[%c9] : memref<18xf32, #tpu.memory_space<smem>>
    %55 = vector.broadcast %53 : f32 to vector<1x256xf32>
    %56 = arith.mulf %55, %41 : vector<1x256xf32>
    %57 = arith.addf %52, %56 : vector<1x256xf32>
    %58 = vector.broadcast %54 : f32 to vector<1x256xf32>
    %59 = arith.mulf %58, %47 : vector<1x256xf32>
    %60 = arith.addf %57, %59 : vector<1x256xf32>
    %c1_22 = arith.constant 1 : index
    %61 = memref.load %arg3[%c1_22] : memref<18xf32, #tpu.memory_space<smem>>
    %c10 = arith.constant 10 : index
    %62 = memref.load %arg3[%c10] : memref<18xf32, #tpu.memory_space<smem>>
    %63 = vector.broadcast %61 : f32 to vector<1x256xf32>
    %64 = arith.mulf %63, %12 : vector<1x256xf32>
    %65 = arith.addf %60, %64 : vector<1x256xf32>
    %66 = vector.broadcast %62 : f32 to vector<1x256xf32>
    %67 = arith.mulf %66, %13 : vector<1x256xf32>
    %68 = arith.addf %65, %67 : vector<1x256xf32>
    %c2_23 = arith.constant 2 : index
    %69 = memref.load %arg3[%c2_23] : memref<18xf32, #tpu.memory_space<smem>>
    %c11 = arith.constant 11 : index
    %70 = memref.load %arg3[%c11] : memref<18xf32, #tpu.memory_space<smem>>
    %71 = vector.broadcast %69 : f32 to vector<1x256xf32>
    %72 = arith.mulf %71, %44 : vector<1x256xf32>
    %73 = arith.addf %68, %72 : vector<1x256xf32>
    %74 = vector.broadcast %70 : f32 to vector<1x256xf32>
    %75 = arith.mulf %74, %50 : vector<1x256xf32>
    %76 = arith.addf %73, %75 : vector<1x256xf32>
    %c16_i32_24 = arith.constant 16 : i32
    %77 = tpu.dynamic_rotate %76 by %c16_i32_24 dim 1 : vector<1x256xf32>, i32 -> vector<1x256xf32>
    %cst_25 = arith.constant 0.000000e+00 : f32
    %78 = vector.broadcast %cst_25 : f32 to vector<1x256xf32>
    %79 = arith.select %36, %78, %77 : vector<1x256xi1>, vector<1x256xf32>
    %80 = arith.addf %51, %79 : vector<1x256xf32>
    %cst_26 = arith.constant 0.000000e+00 : f32
    %81 = vector.broadcast %cst_26 : f32 to vector<1x256xf32>
    %c3_27 = arith.constant 3 : index
    %82 = memref.load %arg3[%c3_27] : memref<18xf32, #tpu.memory_space<smem>>
    %c12 = arith.constant 12 : index
    %83 = memref.load %arg3[%c12] : memref<18xf32, #tpu.memory_space<smem>>
    %84 = vector.broadcast %82 : f32 to vector<1x256xf32>
    %85 = arith.mulf %84, %41 : vector<1x256xf32>
    %86 = arith.addf %81, %85 : vector<1x256xf32>
    %87 = vector.broadcast %83 : f32 to vector<1x256xf32>
    %88 = arith.mulf %87, %47 : vector<1x256xf32>
    %89 = arith.addf %86, %88 : vector<1x256xf32>
    %c4 = arith.constant 4 : index
    %90 = memref.load %arg3[%c4] : memref<18xf32, #tpu.memory_space<smem>>
    %c13 = arith.constant 13 : index
    %91 = memref.load %arg3[%c13] : memref<18xf32, #tpu.memory_space<smem>>
    %92 = vector.broadcast %90 : f32 to vector<1x256xf32>
    %93 = arith.mulf %92, %12 : vector<1x256xf32>
    %94 = arith.addf %89, %93 : vector<1x256xf32>
    %95 = vector.broadcast %91 : f32 to vector<1x256xf32>
    %96 = arith.mulf %95, %13 : vector<1x256xf32>
    %97 = arith.addf %94, %96 : vector<1x256xf32>
    %c5 = arith.constant 5 : index
    %98 = memref.load %arg3[%c5] : memref<18xf32, #tpu.memory_space<smem>>
    %c14 = arith.constant 14 : index
    %99 = memref.load %arg3[%c14] : memref<18xf32, #tpu.memory_space<smem>>
    %100 = vector.broadcast %98 : f32 to vector<1x256xf32>
    %101 = arith.mulf %100, %44 : vector<1x256xf32>
    %102 = arith.addf %97, %101 : vector<1x256xf32>
    %103 = vector.broadcast %99 : f32 to vector<1x256xf32>
    %104 = arith.mulf %103, %50 : vector<1x256xf32>
    %105 = arith.addf %102, %104 : vector<1x256xf32>
    %106 = arith.addf %80, %105 : vector<1x256xf32>
    %cst_28 = arith.constant 0.000000e+00 : f32
    %107 = vector.broadcast %cst_28 : f32 to vector<1x256xf32>
    %c6 = arith.constant 6 : index
    %108 = memref.load %arg3[%c6] : memref<18xf32, #tpu.memory_space<smem>>
    %c15 = arith.constant 15 : index
    %109 = memref.load %arg3[%c15] : memref<18xf32, #tpu.memory_space<smem>>
    %110 = vector.broadcast %108 : f32 to vector<1x256xf32>
    %111 = arith.mulf %110, %41 : vector<1x256xf32>
    %112 = arith.addf %107, %111 : vector<1x256xf32>
    %113 = vector.broadcast %109 : f32 to vector<1x256xf32>
    %114 = arith.mulf %113, %47 : vector<1x256xf32>
    %115 = arith.addf %112, %114 : vector<1x256xf32>
    %c7 = arith.constant 7 : index
    %116 = memref.load %arg3[%c7] : memref<18xf32, #tpu.memory_space<smem>>
    %c16 = arith.constant 16 : index
    %117 = memref.load %arg3[%c16] : memref<18xf32, #tpu.memory_space<smem>>
    %118 = vector.broadcast %116 : f32 to vector<1x256xf32>
    %119 = arith.mulf %118, %12 : vector<1x256xf32>
    %120 = arith.addf %115, %119 : vector<1x256xf32>
    %121 = vector.broadcast %117 : f32 to vector<1x256xf32>
    %122 = arith.mulf %121, %13 : vector<1x256xf32>
    %123 = arith.addf %120, %122 : vector<1x256xf32>
    %c8 = arith.constant 8 : index
    %124 = memref.load %arg3[%c8] : memref<18xf32, #tpu.memory_space<smem>>
    %c17 = arith.constant 17 : index
    %125 = memref.load %arg3[%c17] : memref<18xf32, #tpu.memory_space<smem>>
    %126 = vector.broadcast %124 : f32 to vector<1x256xf32>
    %127 = arith.mulf %126, %44 : vector<1x256xf32>
    %128 = arith.addf %123, %127 : vector<1x256xf32>
    %129 = vector.broadcast %125 : f32 to vector<1x256xf32>
    %130 = arith.mulf %129, %50 : vector<1x256xf32>
    %131 = arith.addf %128, %130 : vector<1x256xf32>
    %c240_i32_29 = arith.constant 240 : i32
    %132 = tpu.dynamic_rotate %131 by %c240_i32_29 dim 1 : vector<1x256xf32>, i32 -> vector<1x256xf32>
    %cst_30 = arith.constant 0.000000e+00 : f32
    %133 = vector.broadcast %cst_30 : f32 to vector<1x256xf32>
    %134 = arith.select %38, %133, %132 : vector<1x256xi1>, vector<1x256xf32>
    %135 = arith.addf %106, %134 : vector<1x256xf32>
    %136 = arith.negf %135 : vector<1x256xf32>
    %137 = math.exp %136 : vector<1x256xf32>
    %cst_31 = arith.constant 1.000000e+00 : f32
    %138 = vector.broadcast %cst_31 : f32 to vector<1x256xf32>
    %139 = arith.addf %138, %137 : vector<1x256xf32>
    %140 = arith.divf %138, %139 : vector<1x256xf32>
    %c0_32 = arith.constant 0 : index
    %c0_33 = arith.constant 0 : index
    %c0_34 = arith.constant 0 : index
    %141 = vector.load %arg4[%c0_32, %c0_33, %c0_34] : memref<1x1x256xf32, #tpu.memory_space<vmem>>, vector<1x1x256xf32>
    %142 = vector.shape_cast %141 : vector<1x1x256xf32> to vector<1x256xf32>
    %143 = vector.shape_cast %140 : vector<1x256xf32> to vector<1x1x256xf32>
    tpu.vector_store %arg4[%c0_32, %c0_33, %c0_34], %143 {strides = array<i32>} : memref<1x1x256xf32, #tpu.memory_space<vmem>>, vector<1x1x256xf32>,
    return
  }
  func.func @transform_0(%arg0: i32, %arg1: i32) -> (i32, i32, i32) {
    %c0_i32 = arith.constant 0 : i32
    %c0_i32_0 = arith.constant 0 : i32
    return %arg0, %arg1, %c0_i32 : i32, i32, i32
  }
  func.func @transform_1(%arg0: i32, %arg1: i32) -> i32 {
    %c0_i32 = arith.constant 0 : i32
    %c0_i32_0 = arith.constant 0 : i32
    return %c0_i32 : i32
  }
  func.func @transform_2(%arg0: i32, %arg1: i32) -> (i32, i32, i32) {
    %c0_i32 = arith.constant 0 : i32
    %c0_i32_0 = arith.constant 0 : i32
    %c0_i32_1 = arith.constant 0 : i32
    return %arg0, %c0_i32, %c0_i32_0 : i32, i32, i32
  }
}

</mosaic_0001>

<llo_original>
// kernel: tpu_custom_call.1
$region0: #{tpu_custom_call.1}
  #allocation0 [shape = 'u32[]', space=smem, size = 0x4, offset = 0x4, fixed_abs, tag = 'smem constant byte address 0x4 - core index']
  #allocation1 [shape = 'u32[72,128]{1,0:T(1,128)}', space=vmem, size = 0x9000, scoped, tag = 'internal scratch']
  #allocation2 [shape = 'f32[1,256]{1,0:T(1,128)}', space=vmem, size = 0x400, scoped, tag = 'scratch operand']
  #allocation3 [shape = 'f32[1,256]{1,0:T(1,128)}', space=vmem, size = 0x400, scoped, tag = 'scratch operand']
  %s0 = inlined_call_operand.hbm [shape: f32[2,4,256], index: 0, kind: input, shape index: {}]
  %s1 = inlined_call_operand.hbm [shape: f32[18], index: 1, kind: input, shape index: {}]
  %s2 = inlined_call_operand.hbm [shape: f32[2,1,256], index: 2, kind: output, shape index: {}]
  %s3 = sld [smem:[#allocation0]]
  $region49: #{tpu_custom_call.1} parent=0
    _
  %s5 = ssub.s32 1, %s3
  %s6 = scalar_select 0, %s5, %s3
  $region1: #{tpu_custom_call.1} parent=0
    #allocation4 [shape = 'u8[8192]{0}', space=vmem, size = 0x2000, scoped, tag = 'input window, operand 0']
    #allocation5 [shape = 's32[2]{0}', space=sflag, size = 0x8, scoped, tag = 'scoped memory for tpu_custom_call.1']
    #allocation6 [shape = 's32[2]{0}', space=sflag, size = 0x8, scoped, tag = 'scoped memory for tpu_custom_call.1']
    #allocation7 [shape = 's32[2]{0}', space=sflag, size = 0x8, scoped, tag = 'scoped memory for tpu_custom_call.1']
    #allocation8 [shape = 'u8[512]{0}', space=smem, size = 0x200, scoped, tag = 'input window, operand 1, single buffered']
    #allocation9 [shape = 'u8[2048]{0}', space=vmem, size = 0x800, scoped, tag = 'output window, operand 0']
    %7 = vsyncpa [#allocation5], 0
    %s8 = scalar_lea.sflag [#allocation5], 1
    %9 = vsyncpa %s8, 0
    %10 = vsyncpa [#allocation7], 0
    %11 = vsyncpa [#allocation6], 0
    %s12 = scalar_lea.sflag [#allocation6], 1
    %13 = vsyncpa %s12, 0
    loop: start=0, step=1, limit=4
    $region2: #{tpu_custom_call.1} parent=1 // loop_pre_header
      _
    $region3: #{tpu_custom_call.1} parent=1 // loop_header
      %s15 = sphi 0, %s19
      %p16 = scmp.ge.s32.totalorder %s15, 4
      %s22 = sphi 0, %s34
      %s23 = sphi 0, %s30
      %s24 = sphi 0, %s22
      %s25 = sphi 0, %s23
      %s26 = sphi 0, %s24
      %s27 = sphi 0, %s25
      %s39 = sphi 0, %s41
      %s42 = sphi 0, %s39
      %s43 = sphi 0, %s42
      %s59 = sphi 0, %s43
      %s63 = sphi 0, %s63
      %s65 = sphi 0, %s63
      %s66 = sphi 0, %s65
      %s80 = sphi 0, %s66
      %s86 = sphi 0, %s88
      %s89 = sphi 0, %s86
      %s90 = sphi 0, %s89
      %s106 = sphi 0, %s90
    $region4: #{tpu_custom_call.1} parent=1 // loop_header_branch
      %18 = sbr.rel (%p16) target = $region8
    $region5: #{tpu_custom_call.1} parent=1 // loop_body
      %s20 = ssub.s32 %s15, 1
      %s21 = ssub.s32 %s15, 2
      %s28 = sadd.s32 1, %s23
      %p29 = scmp.ge.s32.totalorder %s28, 1
      %s30 = scalar_select %p29, 0, %s28
      %s31 = sadd.s32 1, %s22
      %s32 = scalar_select %p29, %s31, %s22
      %p33 = scmp.ge.s32.totalorder %s32, 2
      %s34 = scalar_select %p33, 0, %s32
      %s35 = ssub.s32 %s22, %s34
      %s36 = ssub.s32 %s23, %s30
      %s37 = sor.u32 %s35, %s36
      %p38 = scmp.eq.s32.totalorder %s37, 0
      %s40 = sadd.s32 %s39, 1
      %s41 = scalar_select %p38, %s39, %s40
      %p44 = pneg %p38
      %p45 = scmp.eq.s32.totalorder %s15, 1
      %p46 = por %p44, %p45
      %p47 = scmp.ne.s32.totalorder %s39, %s42
      %p48 = scmp.eq.s32.totalorder %s15, 0
      %p49 = por %p47, %p48
      %p50 = scmp.ne.s32.totalorder %s39, %s42
      %p51 = scmp.eq.s32.totalorder %s20, 1
      %p52 = por %p50, %p51
      %p53 = scmp.ne.s32.totalorder %s42, %s43
      %p54 = scmp.eq.s32.totalorder %s20, 0
      %p55 = por %p53, %p54
      %p56 = scmp.ne.s32.totalorder %s42, %s43
      %p57 = scmp.eq.s32.totalorder %s21, 1
      %p58 = por %p56, %p57
      %p60 = scmp.ne.s32.totalorder %s43, %s59
      %p61 = scmp.eq.s32.totalorder %s21, 0
      %p62 = por %p60, %p61
      %s64 = sadd.s32 %s63, 1
      %p67 = scmp.eq.s32.totalorder %s15, 1
      %p68 = scmp.ne.s32.totalorder %s63, %s65
      %p69 = scmp.eq.s32.totalorder %s15, 0
      %p70 = por %p68, %p69
      %p71 = scmp.ne.s32.totalorder %s63, %s65
      %p72 = scmp.eq.s32.totalorder %s20, 1
      %p73 = por %p71, %p72
      %p74 = scmp.ne.s32.totalorder %s65, %s66
      %p75 = scmp.eq.s32.totalorder %s20, 0
      %p76 = por %p74, %p75
      %p77 = scmp.ne.s32.totalorder %s65, %s66
      %p78 = scmp.eq.s32.totalorder %s21, 1
      %p79 = por %p77, %p78
      %p81 = scmp.ne.s32.totalorder %s66, %s80
      %p82 = scmp.eq.s32.totalorder %s21, 0
      %p83 = por %p81, %p82
      %s84 = ssub.s32 %s22, %s34
      %p85 = scmp.eq.s32.totalorder %s84, 0
      %s87 = sadd.s32 %s86, 1
      %s88 = scalar_select %p85, %s86, %s87
      %p91 = pneg %p85
      %p92 = scmp.eq.s32.totalorder %s15, 1
      %p93 = por %p91, %p92
      %p94 = scmp.ne.s32.totalorder %s86, %s89
      %p95 = scmp.eq.s32.totalorder %s15, 0
      %p96 = por %p94, %p95
      %p97 = scmp.ne.s32.totalorder %s86, %s89
      %p98 = scmp.eq.s32.totalorder %s20, 1
      %p99 = por %p97, %p98
      %p100 = scmp.ne.s32.totalorder %s89, %s90
      %p101 = scmp.eq.s32.totalorder %s20, 0
      %p102 = por %p100, %p101
      %p103 = scmp.ne.s32.totalorder %s89, %s90
      %p104 = scmp.eq.s32.totalorder %s21, 1
      %p105 = por %p103, %p104
      %p107 = scmp.ne.s32.totalorder %s90, %s106
      %p108 = scmp.eq.s32.totalorder %s21, 0
      %p109 = por %p107, %p108
      %p110 = scmp.le.s32.totalorder 1, %s15
      %p111 = scmp.lt.s32.totalorder %s15, 3
      %p112 = pnand %p110, %p111
      %p113 = pneg %p112
      // Predicated region
      $region9: #{tpu_custom_call.1} parent=5 // pred_check
        _
      $region10: #{tpu_custom_call.1} parent=5 // pred_check_branch
        %115 = sbr.rel (%p112) target = $region12
      $region11: #{tpu_custom_call.1} parent=5 // pred_region
        %s116 = ssub.s32 %s15, 1
        // Predicated region
        $region13: #{tpu_custom_call.1} parent=11 // pred_check
          %p117 = pneg %p76
        $region14: #{tpu_custom_call.1} parent=11 // pred_check_branch
          %119 = sbr.rel (%p117) target = $region16
        $region15: #{tpu_custom_call.1} parent=11 // pred_region
          %121 = vsyncadd [#allocation7], 0
          %s123 = sshll.u32 %s1, 4
          %s124 = int_to_ptr.hbm [resolvable:$true] %s123
          %126 = dma.hbm_to_smem %s124, 16, [#allocation8], [#allocation7]
        $region16: #{tpu_custom_call.1} parent=11 // pred_fallthru
          _
      $region12: #{tpu_custom_call.1} parent=5 // pred_fallthru
        _
      %p127 = scmp.lt.s32.totalorder %s15, 2
      // Predicated region
      $region17: #{tpu_custom_call.1} parent=5 // pred_check
        %p128 = pneg %p127
      $region18: #{tpu_custom_call.1} parent=5 // pred_check_branch
        %130 = sbr.rel (%p128) target = $region20
      $region19: #{tpu_custom_call.1} parent=5 // pred_region
        // Predicated region
        $region21: #{tpu_custom_call.1} parent=19 // pred_check
          %p131 = pneg %p49
        $region22: #{tpu_custom_call.1} parent=19 // pred_check_branch
          %133 = sbr.rel (%p131) target = $region24
        $region23: #{tpu_custom_call.1} parent=19 // pred_region
          %s134 = sand.u32 %s39, 1
          %s135 = scalar_lea.sflag [#allocation5], %s134
          %s136 = sand.u32 %s39, 1
          %s137 = smul.addr %s136, 8
          %s138 = scalar_lea.vmem [#allocation4], %s137
          %140 = vsyncadd %s135, 0
          %s141 = smul.addr %s23, 2
          %s142 = smul.addr %s22, 2
          %s143 = sadd.s32 %s141, %s142
          %s144 = smul.addr %s143, 4
          %s145 = scalar_lea.hbm %s0, %s144
          %s147 = sshll.u32 %s145, 4
          %s148 = int_to_ptr.hbm [resolvable:$true] %s147
          %s149 = sshll.u32 %s138, 4
          %s150 = int_to_ptr.vmem [resolvable:$true] %s149
          %152 = dma.hbm_to_vmem [thread:$0]  %s148, 128, %s150, %s135
        $region24: #{tpu_custom_call.1} parent=19 // pred_fallthru
          _
      $region20: #{tpu_custom_call.1} parent=5 // pred_fallthru
        _
      %p153 = scmp.le.s32.totalorder 1, %s15
      %p154 = scmp.lt.s32.totalorder %s15, 3
      %p155 = pnand %p153, %p154
      %p156 = pneg %p155
      // Predicated region
      $region25: #{tpu_custom_call.1} parent=5 // pred_check
        _
      $region26: #{tpu_custom_call.1} parent=5 // pred_check_branch
        %158 = sbr.rel (%p155) target = $region28
      $region27: #{tpu_custom_call.1} parent=5 // pred_region
        %s159 = ssub.s32 %s15, 1
        %s160 = sand.u32 %s42, 1
        %s161 = scalar_lea.sflag [#allocation5], %s160
        %s162 = sand.u32 %s42, 1
        %s163 = smul.addr %s162, 8
        %s164 = scalar_lea.vmem [#allocation4], %s163
        // Predicated region
        $region29: #{tpu_custom_call.1} parent=27 // pred_check
          %p165 = pneg %p55
        $region30: #{tpu_custom_call.1} parent=27 // pred_check_branch
          %167 = sbr.rel (%p165) target = $region32
        $region31: #{tpu_custom_call.1} parent=27 // pred_region
          %169 = dma.done %s161, 128
        $region32: #{tpu_custom_call.1} parent=27 // pred_fallthru
          _
        // Predicated region
        $region33: #{tpu_custom_call.1} parent=27 // pred_check
          %p170 = pneg %p76
        $region34: #{tpu_custom_call.1} parent=27 // pred_check_branch
          %172 = sbr.rel (%p170) target = $region36
        $region35: #{tpu_custom_call.1} parent=27 // pred_region
          %174 = dma.done [#allocation7], 16
        $region36: #{tpu_custom_call.1} parent=27 // pred_fallthru
          _
        %175 = sfence
        %s176 = sand.u32 %s42, 1
        %s177 = scalar_lea.sflag [#allocation5], %s176
        %s178 = sand.u32 %s42, 1
        %s179 = smul.addr %s178, 8
        %s180 = scalar_lea.vmem [#allocation4], %s179
        %p181 = pneg %p55
        %p182 = pneg %p52
        %p183 = pneg %p76
        %p184 = pneg %p73
        %p185 = pneg %p102
        %p186 = pneg %p99
        %s187 = sand.u32 %s89, 1
        %s188 = scalar_lea.sflag [#allocation6], %s187
        %s189 = sand.u32 %s89, 1
        %s190 = smul.addr %s189, 2
        %s191 = scalar_lea.vmem [#allocation9], %s190
        %v192 = vld [vmem:[%s164] ss:$4 sm:$0x3]
        %s193 = scalar_lea.vmem %s164, 1 [#allocation4]
        %v194 = vld [vmem:[%s193] ss:$4 sm:$0x3]
        %v195 = vadd.f32 %v192, %v194
        %v196 = vmax.f32 %v192, %v194
        %s197 = scalar_lea.vmem %s164, 2 [#allocation4]
        %v198 = vld [vmem:[%s197] ss:$4 sm:$0x3]
        %v199 = vadd.f32 %v195, %v198
        %v200 = vmax.f32 %v196, %v198
        %s201 = scalar_lea.vmem %s164, 3 [#allocation4]
        %v202 = vld [vmem:[%s201] ss:$4 sm:$0x3]
        %v203 = vadd.f32 %v199, %v202
        %v204 = vmax.f32 %v200, %v202
        %v205 = vlaneseq
        %v206 = vand.u32 %v205, 127
        %v207 = vadd.s32 %v206, 128
        %vm208 = vcmp.lt.s32.totalorder %v206, 0
        %v209 = vsub.s32 0, %v206
        %v210 = vsel %vm208, %v209, %v206
        %v211 = vshrl.u32 %v210, 4
        %v212 = vand.u32 %v210, 15
        %v213 = vsub.s32 0, %v212
        %v214 = vsel %vm208, %v213, %v212
        %vm215 = vcmp.lt.s32.totalorder %v207, 0
        %v216 = vsub.s32 0, %v207
        %v217 = vsel %vm215, %v216, %v207
        %v218 = vshrl.u32 %v217, 4
        %v219 = vand.u32 %v217, 15
        %v220 = vsub.s32 0, %v219
        %v221 = vsel %vm215, %v220, %v219
        %vm222 = vcmp.ne.s32.totalorder %v214, 0
        %vm223 = vcmp.ne.s32.totalorder %v221, 0
        %vm224 = vcmp.lt.s32.totalorder %v214, 0
        %vm225 = vcmp.lt.s32.totalorder %v221, 0
        %vm226 = vmand %vm224, %vm222
        %vm227 = vmand %vm225, %vm223
        %v228 = vadd.s32 %v214, 16
        %v229 = vadd.s32 %v221, 16
        %v230 = vsel %vm226, %v228, %v214
        %v231 = vsel %vm227, %v229, %v221
        %vm232 = vcmp.lt.s32.totalorder %v230, 1
        %vm233 = vcmp.lt.s32.totalorder %v231, 1
        %vm234 = vcmp.ge.s32.totalorder %v230, 15
        %vm235 = vcmp.ge.s32.totalorder %v231, 15
        %vm236 = vcmp.lt.s32.totalorder %v206, 16
        %vm237 = vcmp.lt.s32.totalorder %v207, 16
        %vm238 = vcmp.ge.s32.totalorder %v206, 240
        %vm239 = vcmp.ge.s32.totalorder %v207, 240
        %v241 = vperm.slane %v203, 0
        %v242 = vperm.slane %v203, 1
        %245 = vrot.lane.b32.xlu0 %v241, 1
        %v246 = vpop.permute.xlu0 %245
        %247 = vrot.lane.b32.xlu0 %v242, 1
        %v248 = vpop.permute.xlu0 %247
        %vm249 = vcmp.lt.s32.totalorder %v206, 1
        %v250 = vsel %vm249, %v246, %v248
        %v251 = vsel %vm249, %v248, %v246
        %v252 = vsel %vm232, 0.0, %v251
        %v253 = vsel %vm233, 0.0, %v250
        %254 = vrot.lane.b32.xlu0 %v241, 127
        %v255 = vpop.permute.xlu0 %254
        %256 = vrot.lane.b32.xlu0 %v242, 127
        %v257 = vpop.permute.xlu0 %256
        %vm258 = vcmp.lt.s32.totalorder %v206, 127
        %v259 = vsel %vm258, %v255, %v257
        %v260 = vsel %vm258, %v257, %v255
        %v261 = vsel %vm234, 0.0, %v259
        %v262 = vsel %vm235, 0.0, %v260
        %v264 = vperm.slane %v204, 0
        %v265 = vperm.slane %v204, 1
        %268 = vrot.lane.b32.xlu0 %v264, 1
        %v269 = vpop.permute.xlu0 %268
        %270 = vrot.lane.b32.xlu0 %v265, 1
        %v271 = vpop.permute.xlu0 %270
        %v272 = vsel %vm249, %v269, %v271
        %v273 = vsel %vm249, %v271, %v269
        %v274 = vsel %vm232, 0.0, %v273
        %v275 = vsel %vm233, 0.0, %v272
        %276 = vrot.lane.b32.xlu0 %v264, 127
        %v277 = vpop.permute.xlu0 %276
        %278 = vrot.lane.b32.xlu0 %v265, 127
        %v279 = vpop.permute.xlu0 %278
        %v280 = vsel %vm258, %v277, %v279
        %v281 = vsel %vm258, %v279, %v277
        %v282 = vsel %vm234, 0.0, %v280
        %v283 = vsel %vm235, 0.0, %v281
        %s284 = sld [smem:[#allocation8]]
        %s285 = sld [smem:[#allocation8 + $0x9]]
        %v286 = vstv %s284
        %v287 = vmul.f32 %v286, %v252
        %v288 = vmul.f32 %v286, %v253
        %v289 = vadd.f32 %v287, 0.0
        %v290 = vadd.f32 %v288, 0.0
        %v291 = vstv %s285
        %v292 = vmul.f32 %v291, %v274
        %v293 = vmul.f32 %v291, %v275
        %v294 = vadd.f32 %v289, %v292
        %v295 = vadd.f32 %v290, %v293
        %s296 = sld [smem:[#allocation8 + $0x1]]
        %s297 = sld [smem:[#allocation8 + $0xa]]
        %v298 = vstv %s296
        %v299 = vmul.f32 %v298, %v203
        %v301 = vperm.slane %v299, 0
        %v302 = vperm.slane %v299, 1
        %v305 = vadd.f32 %v294, %v301
        %v306 = vadd.f32 %v295, %v302
        %v307 = vstv %s297
        %v308 = vmul.f32 %v307, %v204
        %v310 = vperm.slane %v308, 0
        %v311 = vperm.slane %v308, 1
        %v314 = vadd.f32 %v305, %v310
        %v315 = vadd.f32 %v306, %v311
        %s316 = sld [smem:[#allocation8 + $0x2]]
        %s317 = sld [smem:[#allocation8 + $0xb]]
        %v318 = vstv %s316
        %v319 = vmul.f32 %v318, %v261
        %v320 = vmul.f32 %v318, %v262
        %v321 = vadd.f32 %v314, %v319
        %v322 = vadd.f32 %v315, %v320
        %v323 = vstv %s317
        %v324 = vmul.f32 %v323, %v282
        %v325 = vmul.f32 %v323, %v283
        %v326 = vadd.f32 %v321, %v324
        %v327 = vadd.f32 %v322, %v325
        %328 = vrot.lane.b32.xlu0 %v326, 16
        %v329 = vpop.permute.xlu0 %328
        %330 = vrot.lane.b32.xlu0 %v327, 16
        %v331 = vpop.permute.xlu0 %330
        %v332 = vsel %vm236, %v329, %v331
        %v333 = vsel %vm236, %v331, %v329
        %v334 = vsel %vm236, 0.0, %v333
        %v335 = vsel %vm237, 0.0, %v332
        %v336 = vadd.f32 %v334, 0.0
        %v337 = vadd.f32 %v335, 0.0
        %s338 = sld [smem:[#allocation8 + $0x3]]
        %s339 = sld [smem:[#allocation8 + $0xc]]
        %v340 = vstv %s338
        %v341 = vmul.f32 %v340, %v252
        %v342 = vmul.f32 %v340, %v253
        %v343 = vadd.f32 %v341, 0.0
        %v344 = vadd.f32 %v342, 0.0
        %v345 = vstv %s339
        %v346 = vmul.f32 %v345, %v274
        %v347 = vmul.f32 %v345, %v275
        %v348 = vadd.f32 %v343, %v346
        %v349 = vadd.f32 %v344, %v347
        %s350 = sld [smem:[#allocation8 + $0x4]]
        %s351 = sld [smem:[#allocation8 + $0xd]]
        %v352 = vstv %s350
        %v353 = vmul.f32 %v352, %v203
        %v355 = vperm.slane %v353, 0
        %v356 = vperm.slane %v353, 1
        %v359 = vadd.f32 %v348, %v355
        %v360 = vadd.f32 %v349, %v356
        %v361 = vstv %s351
        %v362 = vmul.f32 %v361, %v204
        %v364 = vperm.slane %v362, 0
        %v365 = vperm.slane %v362, 1
        %v368 = vadd.f32 %v359, %v364
        %v369 = vadd.f32 %v360, %v365
        %s370 = sld [smem:[#allocation8 + $0x5]]
        %s371 = sld [smem:[#allocation8 + $0xe]]
        %v372 = vstv %s370
        %v373 = vmul.f32 %v372, %v261
        %v374 = vmul.f32 %v372, %v262
        %v375 = vadd.f32 %v368, %v373
        %v376 = vadd.f32 %v369, %v374
        %v377 = vstv %s371
        %v378 = vmul.f32 %v377, %v282
        %v379 = vmul.f32 %v377, %v283
        %v380 = vadd.f32 %v375, %v378
        %v381 = vadd.f32 %v376, %v379
        %v382 = vadd.f32 %v336, %v380
        %v383 = vadd.f32 %v337, %v381
        %s384 = sld [smem:[#allocation8 + $0x6]]
        %s385 = sld [smem:[#allocation8 + $0xf]]
        %v386 = vstv %s384
        %v387 = vmul.f32 %v386, %v252
        %v388 = vmul.f32 %v386, %v253
        %v389 = vadd.f32 %v387, 0.0
        %v390 = vadd.f32 %v388, 0.0
        %v391 = vstv %s385
        %v392 = vmul.f32 %v391, %v274
        %v393 = vmul.f32 %v391, %v275
        %v394 = vadd.f32 %v389, %v392
        %v395 = vadd.f32 %v390, %v393
        %s396 = sld [smem:[#allocation8 + $0x7]]
        %s397 = sld [smem:[#allocation8 + $0x10]]
        %v398 = vstv %s396
        %v399 = vmul.f32 %v398, %v203
        %v401 = vperm.slane %v399, 0
        %v402 = vperm.slane %v399, 1
        %v405 = vadd.f32 %v394, %v401
        %v406 = vadd.f32 %v395, %v402
        %v407 = vstv %s397
        %v408 = vmul.f32 %v407, %v204
        %v410 = vperm.slane %v408, 0
        %v411 = vperm.slane %v408, 1
        %v414 = vadd.f32 %v405, %v410
        %v415 = vadd.f32 %v406, %v411
        %s416 = sld [smem:[#allocation8 + $0x8]]
        %s417 = sld [smem:[#allocation8 + $0x11]]
        %v418 = vstv %s416
        %v419 = vmul.f32 %v418, %v261
        %v420 = vmul.f32 %v418, %v262
        %v421 = vadd.f32 %v414, %v419
        %v422 = vadd.f32 %v415, %v420
        %v423 = vstv %s417
        %v424 = vmul.f32 %v423, %v282
        %v425 = vmul.f32 %v423, %v283
        %v426 = vadd.f32 %v421, %v424
        %v427 = vadd.f32 %v422, %v425
        %428 = vrot.lane.b32.xlu0 %v426, 112
        %v429 = vpop.permute.xlu0 %428
        %430 = vrot.lane.b32.xlu0 %v427, 112
        %v431 = vpop.permute.xlu0 %430
        %vm432 = vcmp.lt.s32.totalorder %v206, 112
        %v433 = vsel %vm432, %v429, %v431
        %v434 = vsel %vm432, %v431, %v429
        %v435 = vsel %vm238, 0.0, %v433
        %v436 = vsel %vm239, 0.0, %v434
        %v437 = vadd.f32 %v382, %v435
        %v438 = vadd.f32 %v383, %v436
        %v439 = vxor.u32 %v437, 2147483648
        %v440 = vxor.u32 %v438, 2147483648
        %v441 = vmul.f32 %v439, 1.442695
        %v442 = vpow.pop %v441
        %v443 = vmul.f32 %v440, 1.442695
        %v444 = vpow.pop %v443
        %v445 = vadd.f32 %v442, 1.0
        %v446 = vadd.f32 %v444, 1.0
        %v447 = vrcp.pop %v445
        %v448 = vmul.f32 %v445, %v447
        %v449 = vsub.f32 1.0, %v448
        %v450 = vmul.f32 %v447, %v449
        %v451 = vadd.f32 %v447, %v450
        %vm452 = vweird.f32 %v445
        %vm453 = vweird.f32 %v447
        %vm454 = vmor %vm452, %vm453
        %v455 = vsel %vm454, %v447, %v451
        %v456 = vand.u32 2147483647, %v445
        %vm457 = vcmp.eq.f32.partialorder %v456, 8.507059e+37
        %v458 = vand.u32 %v445, 2147483648
        %v459 = vor.u32 1.1754944e-38, %v458
        %v460 = vsel %vm457, %v459, %v455
        %v461 = vmul.f32 1.0, %v460
        %v462 = vrcp.pop %v446
        %v463 = vmul.f32 %v446, %v462
        %v464 = vsub.f32 1.0, %v463
        %v465 = vmul.f32 %v462, %v464
        %v466 = vadd.f32 %v462, %v465
        %vm467 = vweird.f32 %v446
        %vm468 = vweird.f32 %v462
        %vm469 = vmor %vm467, %vm468
        %v470 = vsel %vm469, %v462, %v466
        %v471 = vand.u32 2147483647, %v446
        %vm472 = vcmp.eq.f32.partialorder %v471, 8.507059e+37
        %v473 = vand.u32 %v446, 2147483648
        %v474 = vor.u32 1.1754944e-38, %v473
        %v475 = vsel %vm472, %v474, %v470
        %v476 = vmul.f32 1.0, %v475
        %v479 = vrot.slane %v476, 7
        %vm480 = vcmask 1040384
        %v481 = vsel %vm480, %v461, %v479
        %v483 = vlaneseq
        %vm484 = vcmp.ge.s32.totalorder %v483, 0
        %vm485 = vcmp.lt.s32.totalorder %v483, 256
        %vm486 = vmand %vm484, %vm485
        %487 = vst.msk [vmem:[%s191] sm:$0x3] %vm486, %v481
        %s488 = sand.u32 %s89, 1
        %s489 = scalar_lea.sflag [#allocation6], %s488
        %s490 = sand.u32 %s89, 1
        %s491 = smul.addr %s490, 2
        %s492 = scalar_lea.vmem [#allocation9], %s491
        // Predicated region
        $region37: #{tpu_custom_call.1} parent=27 // pred_check
          %p493 = pneg %p99
        $region38: #{tpu_custom_call.1} parent=27 // pred_check_branch
          %495 = sbr.rel (%p493) target = $region40
        $region39: #{tpu_custom_call.1} parent=27 // pred_region
          %497 = vsyncadd %s489, 0
          %s498 = smul.addr %s24, 2
          %s499 = scalar_lea.hbm %s2, %s498
          %s501 = sshll.u32 %s492, 4
          %s502 = int_to_ptr.vmem [resolvable:$true] %s501
          %s503 = sshll.u32 %s499, 4
          %s504 = int_to_ptr.hbm [resolvable:$true] %s503
          %506 = dma.vmem_to_hbm [thread:$0]  %s502, 32, %s504, %s489
        $region40: #{tpu_custom_call.1} parent=27 // pred_fallthru
          _
      $region28: #{tpu_custom_call.1} parent=5 // pred_fallthru
        _
      %p507 = scmp.le.s32.totalorder 2, %s15
      // Predicated region
      $region41: #{tpu_custom_call.1} parent=5 // pred_check
        %p508 = pneg %p507
      $region42: #{tpu_custom_call.1} parent=5 // pred_check_branch
        %510 = sbr.rel (%p508) target = $region44
      $region43: #{tpu_custom_call.1} parent=5 // pred_region
        %s511 = ssub.s32 %s15, 2
        // Predicated region
        $region45: #{tpu_custom_call.1} parent=43 // pred_check
          %p512 = pneg %p105
        $region46: #{tpu_custom_call.1} parent=43 // pred_check_branch
          %514 = sbr.rel (%p512) target = $region48
        $region47: #{tpu_custom_call.1} parent=43 // pred_region
          %s515 = sand.u32 %s90, 1
          %s516 = scalar_lea.sflag [#allocation6], %s515
          %s517 = sand.u32 %s90, 1
          %s518 = smul.addr %s517, 2
          %s519 = scalar_lea.vmem [#allocation9], %s518
          %521 = dma.done %s516, 32
        $region48: #{tpu_custom_call.1} parent=43 // pred_fallthru
          _
      $region44: #{tpu_custom_call.1} parent=5 // pred_fallthru
        _
    $region6: #{tpu_custom_call.1} parent=1 // loop_footer
      %s19 = sadd.s32 1, %s15
    $region7: #{tpu_custom_call.1} parent=1 // loop_footer_branch
      %14 = sbr.rel target = $region3
    $region8: #{tpu_custom_call.1} parent=1 // loop_exit
      _
    %522 = vsyncpa [#allocation5], 1
    %s523 = scalar_lea.sflag [#allocation5], 1
    %524 = vsyncpa %s523, 1
    %525 = vsyncpa [#allocation6], 1
    %s526 = scalar_lea.sflag [#allocation6], 1
    %527 = vsyncpa %s526, 1
    %528 = vsyncpa [#allocation7], 1
    %s529 = scalar_lea.sflag [#allocation7], 1
    %530 = vsyncpa %s529, 1

</llo_original>
